<compile_context>
chip_gen: v7x
topology: tpu7x:2x2x1
jax: 0.10.0
libtpu: 0.0.40
codegen_flags: <defaults>
</compile_context>

<pallas_src>
import functools

import jax
import jax.numpy as jnp
from jax.experimental import pallas as pl
from jax.experimental.pallas import tpu as pltpu

LN_EPS = 1e-5  # PyTorch nn.LayerNorm default


def _round_up(x, m):
    return (x + m - 1) // m * m


def _layernorm(h, gamma, beta):
    mu = jnp.mean(h, axis=-1, keepdims=True)
    var = jnp.mean((h - mu) * (h - mu), axis=-1, keepdims=True)
    return (h - mu) * jax.lax.rsqrt(var + LN_EPS) * gamma + beta


def _critic_kernel(*refs, dropout_p, has_dropout):
    if has_dropout:
        (x_ref, a_ref, rand_ref,
         w1_ref, w2x_ref, w3_ref, small_ref, out_ref) = refs
    else:
        (x_ref, a_ref,
         w1_ref, w2x_ref, w3_ref, small_ref, out_ref) = refs
        rand_ref = None

    # ---- unpack the packed small parameters (single tiny VMEM load) ----
    P = small_ref[...].astype(jnp.float32)         # (11 + A, H)
    b1, g1, be1 = P[0:1], P[1:2], P[2:3]
    b2, g2, be2 = P[3:4], P[4:5], P[5:6]
    b3, g3, be3 = P[6:7], P[7:8], P[8:9]
    wv = P[9:10]                                   # V weight as a row (1, H)
    bv = P[10:11, 0:1]                             # V bias (1, 1)

    x = x_ref[...]
    a = a_ref[...].astype(jnp.float32)
    A = a.shape[1]

    # ---- layer 1: Linear -> LayerNorm -> ReLU ----
    h1 = jnp.dot(x.astype(w1_ref.dtype), w1_ref[...],
                 preferred_element_type=jnp.float32) + b1
    h1 = jnp.maximum(_layernorm(h1, g1, be1), 0.0)

    # ---- layer 2: cat([h1, actions]) @ W2 ----
    # h1 half on the MXU; the K=A (tiny) action half as an unrolled VPU
    # broadcast multiply-add (saves an MXU push/drain round-trip).
    h2 = jnp.dot(h1.astype(w2x_ref.dtype), w2x_ref[...],
                 preferred_element_type=jnp.float32) + b2
    for k in range(A):
        h2 = h2 + a[:, k:k + 1] * P[11 + k:12 + k, :]
    h2 = jnp.maximum(_layernorm(h2, g2, be2), 0.0)

    # ---- dropout: F.dropout(x, p=kr1, training=mode) ----
    # TODO(synk): dropout is statistically equivalent (Bernoulli(1-p) mask +
    # 1/(1-p) scale) but not bit-matched to torch's RNG; random uniforms are
    # generated host-side with jax.random and streamed per batch tile.
    if has_dropout:
        if dropout_p >= 1.0:
            h2 = jnp.zeros_like(h2)
        else:
            u = rand_ref[...]
            keep = u >= jnp.float32(dropout_p)
            scale = jnp.float32(1.0 / (1.0 - dropout_p))
            h2 = jnp.where(keep, h2 * scale, 0.0)

    # ---- layer 3: Linear -> LayerNorm -> ReLU ----
    h3 = jnp.dot(h2.astype(w3_ref.dtype), w3_ref[...],
                 preferred_element_type=jnp.float32) + b3
    h3 = jnp.maximum(_layernorm(h3, g3, be3), 0.0)

    # ---- value head (N = 1): keep it off the MXU, VPU mul + lane reduce ----
    out_ref[...] = jnp.sum(h3 * wv, axis=-1, keepdims=True) + bv


def critic_forward(packed, inputs, actions, kr1, mode, seed=0):
    """Pallas equivalent of Critic.forward(inputs, actions, kr1, mode)."""
    B, in1 = inputs.shape
    A = actions.shape[1]
    H = packed["w1"].shape[1]
    R = packed["small"].shape[0]

    # Batch tiling: weights stay resident across grid steps, activations are
    # double-buffered by BlockSpec.  Pad batch to a multiple of the tile.
    TILE_B = 512 if B >= 512 else max(8, _round_up(B, 8))
    B_pad = _round_up(B, TILE_B)
    if B_pad != B:
        inputs = jnp.pad(inputs, ((0, B_pad - B), (0, 0)))
        actions = jnp.pad(actions, ((0, B_pad - B), (0, 0)))

    dropout_p = float(kr1)
    has_dropout = bool(mode) and dropout_p > 0.0

    kernel = functools.partial(_critic_kernel,
                               dropout_p=dropout_p,
                               has_dropout=has_dropout)

    in_specs = [
        pl.BlockSpec((TILE_B, in1), lambda i: (i, 0)),   # inputs tile
        pl.BlockSpec((TILE_B, A), lambda i: (i, 0)),     # actions tile
    ]
    operands = [inputs, actions]

    if has_dropout:
        rand = jax.random.uniform(jax.random.PRNGKey(int(seed)),
                                  (B_pad, H), jnp.float32)
        in_specs.append(pl.BlockSpec((TILE_B, H), lambda i: (i, 0)))
        operands.append(rand)

    in_specs += [
        pl.BlockSpec((in1, H), lambda i: (0, 0)),        # W1 (resident)
        pl.BlockSpec((H, H), lambda i: (0, 0)),          # W2[:H] (resident)
        pl.BlockSpec((H, H), lambda i: (0, 0)),          # W3 (resident)
        pl.BlockSpec((R, H), lambda i: (0, 0)),          # packed small params
    ]
    operands += [packed["w1"], packed["w2x"], packed["w3"], packed["small"]]

    grid_spec = pltpu.PrefetchScalarGridSpec(
        num_scalar_prefetch=0,
        grid=(B_pad // TILE_B,),
        in_specs=in_specs,
        out_specs=pl.BlockSpec((TILE_B, 1), lambda i: (i, 0)),
    )

    out = pl.pallas_call(
        kernel,
        out_shape=jax.ShapeDtypeStruct((B_pad, 1), jnp.float32),
        grid_spec=grid_spec,
        compiler_params=pltpu.CompilerParams(
            dimension_semantics=("parallel",)),
    )(*operands)

    return out[:B]


def make_params(key, num_inputs, hidden, action_space):
    """Deterministic synthetic parameters matching the PyTorch module shapes."""
    ks = jax.random.split(key, 8)
    in1 = num_inputs + 1
    in2 = hidden + action_space

    def lin(k, fan_in, fan_out):
        bound = 1.0 / jnp.sqrt(fan_in)
        kw, kb = jax.random.split(k)
        w = jax.random.uniform(kw, (fan_in, fan_out), jnp.float32, -bound, bound)
        b = jax.random.uniform(kb, (1, fan_out), jnp.float32, -bound, bound)
        return w, b

    w1, b1 = lin(ks[0], in1, hidden)
    w2, b2 = lin(ks[1], in2, hidden)
    w3, b3 = lin(ks[2], hidden, hidden)
    wv, bv = lin(ks[3], hidden, 1)
    wv = wv * 0.01  # self.V.weight.data.mul_(0.01)
    bv = bv * 0.01  # self.V.bias.data.mul_(0.01)

    ones = jnp.ones((1, hidden), jnp.float32)
    zeros = jnp.zeros((1, hidden), jnp.float32)

    return {
        "w1": w1, "b1": b1, "g1": ones, "be1": zeros,
        "w2x": w2[:hidden], "w2a": w2[hidden:], "b2": b2, "g2": ones, "be2": zeros,
        "w3": w3, "b3": b3, "g3": ones, "be3": zeros,
        "wv": wv, "bv": bv,
    }


def pack_params(p, matmul_dtype=jnp.float32):
    """Pack the small per-layer vectors (+V head +W2-action half) into one array.

    Rows: [b1, g1, be1, b2, g2, be2, b3, g3, be3, wv_row, bv_bcast, w2a (A rows)].
    `matmul_dtype=jnp.bfloat16` halves resident-weight VMEM and uses the bf16
    MXU path on v6e/v7x; LayerNorm / dropout math stays in f32 regardless.
    """
    H = p["w1"].shape[1]
    small = jnp.concatenate([
        p["b1"], p["g1"], p["be1"],
        p["b2"], p["g2"], p["be2"],
        p["b3"], p["g3"], p["be3"],
        p["wv"].reshape(1, H),
        jnp.broadcast_to(p["bv"].reshape(1, 1), (1, H)),
        p["w2a"],
    ], axis=0).astype(jnp.float32)
    return {
        "w1": p["w1"].astype(matmul_dtype),
        "w2x": p["w2x"].astype(matmul_dtype),
        "w3": p["w3"].astype(matmul_dtype),
        "small": small,
    }


def _reference_forward(params, inputs, actions, kr1, mode):
    """Pure-JAX reference (dropout-disabled path only)."""
    def ln(h, g, b):
        mu = jnp.mean(h, axis=-1, keepdims=True)
        var = jnp.mean((h - mu) ** 2, axis=-1, keepdims=True)
        return (h - mu) / jnp.sqrt(var + LN_EPS) * g + b

    h1 = jax.nn.relu(ln(inputs @ params["w1"] + params["b1"],
                        params["g1"], params["be1"]))
    cat = jnp.concatenate([h1, actions], axis=1)
    w2 = jnp.concatenate([params["w2x"], params["w2a"]], axis=0)
    h2 = jax.nn.relu(ln(cat @ w2 + params["b2"], params["g2"], params["be2"]))
    h3 = jax.nn.relu(ln(h2 @ params["w3"] + params["b3"],
                        params["g3"], params["be3"]))
    return h3 @ params["wv"] + params["bv"]


if __name__ == "__main__":
    key = jax.random.PRNGKey(0)
    k_p, k_x, k_a = jax.random.split(key, 3)

    B = 8
    num_inputs = 15          # forward sees num_inputs + 1 = 16 features
    hidden = 32
    action_space = 4

    params = make_params(k_p, num_inputs, hidden, action_space)
    packed = pack_params(params)                      # default f32 matmuls
    inputs = jax.random.normal(k_x, (B, num_inputs + 1), jnp.float32)
    actions = jax.random.normal(k_a, (B, action_space), jnp.float32)

    kr1 = 0.2

    # Eval path (mode=False -> dropout is identity): check against pure-JAX ref.
    v = critic_forward(packed, inputs, actions, kr1, False)
    v = jax.block_until_ready(v)
    v_ref = _reference_forward(params, inputs, actions, kr1, False)
    assert v.shape == (B, 1)
    assert jnp.allclose(v, v_ref, atol=1e-4, rtol=1e-4), (v, v_ref)

    # Training path smoke test (host-generated dropout randomness).
    v_tr = critic_forward(packed, inputs, actions, kr1, True, seed=123)
    v_tr = jax.block_until_ready(v_tr)
    assert v_tr.shape == (B, 1)
    assert bool(jnp.all(jnp.isfinite(v_tr)))

    print("KERNEL_OK")
</pallas_src>

<mosaic_0001>
module attributes {stable_mosaic.version = 11 : i64} {
  func.func @_critic_kernel(%arg0: i32, %arg1: memref<8x16xf32, #tpu.memory_space<vmem>>, %arg2: memref<8x4xf32, #tpu.memory_space<vmem>>, %arg3: memref<16x32xf32, #tpu.memory_space<vmem>>, %arg4: memref<32x32xf32, #tpu.memory_space<vmem>>, %arg5: memref<32x32xf32, #tpu.memory_space<vmem>>, %arg6: memref<15x32xf32, #tpu.memory_space<vmem>>, %arg7: memref<8x1xf32, #tpu.memory_space<vmem>>) attributes {dimension_semantics = [#tpu.dimension_semantics<parallel>], iteration_bounds = array<i64: 1>, scalar_prefetch = 0 : i64, scratch_operands = 0 : i64, tpu.core_type = #tpu.core_type<tc>, window_params = [{transform_indices = @transform_0, window_bounds = array<i64: 8, 16>}, {transform_indices = @transform_1, window_bounds = array<i64: 8, 4>}, {pipeline_mode = #tpu.pipeline_mode<synchronous>, transform_indices = @transform_2, window_bounds = array<i64: 16, 32>}, {pipeline_mode = #tpu.pipeline_mode<synchronous>, transform_indices = @transform_3, window_bounds = array<i64: 32, 32>}, {pipeline_mode = #tpu.pipeline_mode<synchronous>, transform_indices = @transform_4, window_bounds = array<i64: 32, 32>}, {pipeline_mode = #tpu.pipeline_mode<synchronous>, transform_indices = @transform_5, window_bounds = array<i64: 15, 32>}, {transform_indices = @transform_6, window_bounds = array<i64: 8, 1>}]} {
    %c0 = arith.constant 0 : index
    %c0_0 = arith.constant 0 : index
    %0 = vector.load %arg6[%c0, %c0_0] : memref<15x32xf32, #tpu.memory_space<vmem>>, vector<15x32xf32>
    %1 = vector.extract_strided_slice %0 {offsets = [0, 0], sizes = [1, 32], strides = [1, 1]} : vector<15x32xf32> to vector<1x32xf32>
    %2 = vector.extract_strided_slice %0 {offsets = [1, 0], sizes = [1, 32], strides = [1, 1]} : vector<15x32xf32> to vector<1x32xf32>
    %3 = vector.extract_strided_slice %0 {offsets = [2, 0], sizes = [1, 32], strides = [1, 1]} : vector<15x32xf32> to vector<1x32xf32>
    %4 = vector.extract_strided_slice %0 {offsets = [3, 0], sizes = [1, 32], strides = [1, 1]} : vector<15x32xf32> to vector<1x32xf32>
    %5 = vector.extract_strided_slice %0 {offsets = [4, 0], sizes = [1, 32], strides = [1, 1]} : vector<15x32xf32> to vector<1x32xf32>
    %6 = vector.extract_strided_slice %0 {offsets = [5, 0], sizes = [1, 32], strides = [1, 1]} : vector<15x32xf32> to vector<1x32xf32>
    %7 = vector.extract_strided_slice %0 {offsets = [6, 0], sizes = [1, 32], strides = [1, 1]} : vector<15x32xf32> to vector<1x32xf32>
    %8 = vector.extract_strided_slice %0 {offsets = [7, 0], sizes = [1, 32], strides = [1, 1]} : vector<15x32xf32> to vector<1x32xf32>
    %9 = vector.extract_strided_slice %0 {offsets = [8, 0], sizes = [1, 32], strides = [1, 1]} : vector<15x32xf32> to vector<1x32xf32>
    %10 = vector.extract_strided_slice %0 {offsets = [9, 0], sizes = [1, 32], strides = [1, 1]} : vector<15x32xf32> to vector<1x32xf32>
    %11 = vector.extract_strided_slice %0 {offsets = [10, 0], sizes = [1, 1], strides = [1, 1]} : vector<15x32xf32> to vector<1x1xf32>
    %c0_1 = arith.constant 0 : index
    %c0_2 = arith.constant 0 : index
    %12 = vector.load %arg1[%c0_1, %c0_2] : memref<8x16xf32, #tpu.memory_space<vmem>>, vector<8x16xf32>
    %c0_3 = arith.constant 0 : index
    %c0_4 = arith.constant 0 : index
    %13 = vector.load %arg2[%c0_3, %c0_4] : memref<8x4xf32, #tpu.memory_space<vmem>>, vector<8x4xf32>
    %c0_5 = arith.constant 0 : index
    %c0_6 = arith.constant 0 : index
    %14 = vector.load %arg3[%c0_5, %c0_6] : memref<16x32xf32, #tpu.memory_space<vmem>>, vector<16x32xf32>
    %cst = arith.constant dense<0.000000e+00> : vector<8x32xf32>
    %15 = tpu.matmul %12, %14, %cst {dimension_numbers = #tpu.dot_dimension_numbers<[1], [0], [0], [1], [0, 0, 1, 1], [], []>} : vector<8x16xf32>, vector<16x32xf32>, vector<8x32xf32> -> vector<8x32xf32>
    %16 = vector.broadcast %1 : vector<1x32xf32> to vector<8x32xf32>
    %17 = arith.addf %15, %16 : vector<8x32xf32>
    %cst_7 = arith.constant dense<0.000000e+00> : vector<8xf32>
    %18 = vector.multi_reduction <add>, %17, %cst_7 [1] : vector<8x32xf32> to vector<8xf32>
    %19 = vector.shape_cast %18 : vector<8xf32> to vector<8x1xf32>
    %cst_8 = arith.constant 3.200000e+01 : f32
    %20 = vector.broadcast %cst_8 : f32 to vector<8x1xf32>
    %21 = arith.divf %19, %20 : vector<8x1xf32>
    %22 = vector.broadcast %21 : vector<8x1xf32> to vector<8x32xf32>
    %23 = arith.subf %17, %22 : vector<8x32xf32>
    %24 = vector.broadcast %21 : vector<8x1xf32> to vector<8x32xf32>
    %25 = arith.subf %17, %24 : vector<8x32xf32>
    %26 = arith.mulf %23, %25 : vector<8x32xf32>
    %cst_9 = arith.constant dense<0.000000e+00> : vector<8xf32>
    %27 = vector.multi_reduction <add>, %26, %cst_9 [1] : vector<8x32xf32> to vector<8xf32>
    %28 = vector.shape_cast %27 : vector<8xf32> to vector<8x1xf32>
    %cst_10 = arith.constant 3.200000e+01 : f32
    %29 = vector.broadcast %cst_10 : f32 to vector<8x1xf32>
    %30 = arith.divf %28, %29 : vector<8x1xf32>
    %31 = vector.broadcast %21 : vector<8x1xf32> to vector<8x32xf32>
    %32 = arith.subf %17, %31 : vector<8x32xf32>
    %cst_11 = arith.constant 9.99999974E-6 : f32
    %33 = vector.broadcast %cst_11 : f32 to vector<8x1xf32>
    %34 = arith.addf %30, %33 : vector<8x1xf32>
    %35 = math.rsqrt %34 : vector<8x1xf32>
    %36 = vector.broadcast %35 : vector<8x1xf32> to vector<8x32xf32>
    %37 = arith.mulf %32, %36 : vector<8x32xf32>
    %38 = vector.broadcast %2 : vector<1x32xf32> to vector<8x32xf32>
    %39 = arith.mulf %37, %38 : vector<8x32xf32>
    %40 = vector.broadcast %3 : vector<1x32xf32> to vector<8x32xf32>
    %41 = arith.addf %39, %40 : vector<8x32xf32>
    %cst_12 = arith.constant 0.000000e+00 : f32
    %42 = vector.broadcast %cst_12 : f32 to vector<8x32xf32>
    %43 = arith.maximumf %41, %42 : vector<8x32xf32>
    %c0_13 = arith.constant 0 : index
    %c0_14 = arith.constant 0 : index
    %44 = vector.load %arg4[%c0_13, %c0_14] : memref<32x32xf32, #tpu.memory_space<vmem>>, vector<32x32xf32>
    %cst_15 = arith.constant dense<0.000000e+00> : vector<8x32xf32>
    %45 = tpu.matmul %43, %44, %cst_15 {dimension_numbers = #tpu.dot_dimension_numbers<[1], [0], [0], [1], [0, 0, 1, 1], [], []>} : vector<8x32xf32>, vector<32x32xf32>, vector<8x32xf32> -> vector<8x32xf32>
    %46 = vector.broadcast %4 : vector<1x32xf32> to vector<8x32xf32>
    %47 = arith.addf %45, %46 : vector<8x32xf32>
    %48 = vector.extract_strided_slice %13 {offsets = [0, 0], sizes = [8, 1], strides = [1, 1]} : vector<8x4xf32> to vector<8x1xf32>
    %49 = vector.extract_strided_slice %0 {offsets = [11, 0], sizes = [1, 32], strides = [1, 1]} : vector<15x32xf32> to vector<1x32xf32>
    %50 = vector.broadcast %48 : vector<8x1xf32> to vector<8x32xf32>
    %51 = vector.broadcast %49 : vector<1x32xf32> to vector<8x32xf32>
    %52 = arith.mulf %50, %51 : vector<8x32xf32>
    %53 = arith.addf %47, %52 : vector<8x32xf32>
    %54 = vector.extract_strided_slice %13 {offsets = [0, 1], sizes = [8, 1], strides = [1, 1]} : vector<8x4xf32> to vector<8x1xf32>
    %55 = vector.extract_strided_slice %0 {offsets = [12, 0], sizes = [1, 32], strides = [1, 1]} : vector<15x32xf32> to vector<1x32xf32>
    %56 = vector.broadcast %54 : vector<8x1xf32> to vector<8x32xf32>
    %57 = vector.broadcast %55 : vector<1x32xf32> to vector<8x32xf32>
    %58 = arith.mulf %56, %57 : vector<8x32xf32>
    %59 = arith.addf %53, %58 : vector<8x32xf32>
    %60 = vector.extract_strided_slice %13 {offsets = [0, 2], sizes = [8, 1], strides = [1, 1]} : vector<8x4xf32> to vector<8x1xf32>
    %61 = vector.extract_strided_slice %0 {offsets = [13, 0], sizes = [1, 32], strides = [1, 1]} : vector<15x32xf32> to vector<1x32xf32>
    %62 = vector.broadcast %60 : vector<8x1xf32> to vector<8x32xf32>
    %63 = vector.broadcast %61 : vector<1x32xf32> to vector<8x32xf32>
    %64 = arith.mulf %62, %63 : vector<8x32xf32>
    %65 = arith.addf %59, %64 : vector<8x32xf32>
    %66 = vector.extract_strided_slice %13 {offsets = [0, 3], sizes = [8, 1], strides = [1, 1]} : vector<8x4xf32> to vector<8x1xf32>
    %67 = vector.extract_strided_slice %0 {offsets = [14, 0], sizes = [1, 32], strides = [1, 1]} : vector<15x32xf32> to vector<1x32xf32>
    %68 = vector.broadcast %66 : vector<8x1xf32> to vector<8x32xf32>
    %69 = vector.broadcast %67 : vector<1x32xf32> to vector<8x32xf32>
    %70 = arith.mulf %68, %69 : vector<8x32xf32>
    %71 = arith.addf %65, %70 : vector<8x32xf32>
    %cst_16 = arith.constant dense<0.000000e+00> : vector<8xf32>
    %72 = vector.multi_reduction <add>, %71, %cst_16 [1] : vector<8x32xf32> to vector<8xf32>
    %73 = vector.shape_cast %72 : vector<8xf32> to vector<8x1xf32>
    %cst_17 = arith.constant 3.200000e+01 : f32
    %74 = vector.broadcast %cst_17 : f32 to vector<8x1xf32>
    %75 = arith.divf %73, %74 : vector<8x1xf32>
    %76 = vector.broadcast %75 : vector<8x1xf32> to vector<8x32xf32>
    %77 = arith.subf %71, %76 : vector<8x32xf32>
    %78 = vector.broadcast %75 : vector<8x1xf32> to vector<8x32xf32>
    %79 = arith.subf %71, %78 : vector<8x32xf32>
    %80 = arith.mulf %77, %79 : vector<8x32xf32>
    %cst_18 = arith.constant dense<0.000000e+00> : vector<8xf32>
    %81 = vector.multi_reduction <add>, %80, %cst_18 [1] : vector<8x32xf32> to vector<8xf32>
    %82 = vector.shape_cast %81 : vector<8xf32> to vector<8x1xf32>
    %cst_19 = arith.constant 3.200000e+01 : f32
    %83 = vector.broadcast %cst_19 : f32 to vector<8x1xf32>
    %84 = arith.divf %82, %83 : vector<8x1xf32>
    %85 = vector.broadcast %75 : vector<8x1xf32> to vector<8x32xf32>
    %86 = arith.subf %71, %85 : vector<8x32xf32>
    %cst_20 = arith.constant 9.99999974E-6 : f32
    %87 = vector.broadcast %cst_20 : f32 to vector<8x1xf32>
    %88 = arith.addf %84, %87 : vector<8x1xf32>
    %89 = math.rsqrt %88 : vector<8x1xf32>
    %90 = vector.broadcast %89 : vector<8x1xf32> to vector<8x32xf32>
    %91 = arith.mulf %86, %90 : vector<8x32xf32>
    %92 = vector.broadcast %5 : vector<1x32xf32> to vector<8x32xf32>
    %93 = arith.mulf %91, %92 : vector<8x32xf32>
    %94 = vector.broadcast %6 : vector<1x32xf32> to vector<8x32xf32>
    %95 = arith.addf %93, %94 : vector<8x32xf32>
    %cst_21 = arith.constant 0.000000e+00 : f32
    %96 = vector.broadcast %cst_21 : f32 to vector<8x32xf32>
    %97 = arith.maximumf %95, %96 : vector<8x32xf32>
    %c0_22 = arith.constant 0 : index
    %c0_23 = arith.constant 0 : index
    %98 = vector.load %arg5[%c0_22, %c0_23] : memref<32x32xf32, #tpu.memory_space<vmem>>, vector<32x32xf32>
    %cst_24 = arith.constant dense<0.000000e+00> : vector<8x32xf32>
    %99 = tpu.matmul %97, %98, %cst_24 {dimension_numbers = #tpu.dot_dimension_numbers<[1], [0], [0], [1], [0, 0, 1, 1], [], []>} : vector<8x32xf32>, vector<32x32xf32>, vector<8x32xf32> -> vector<8x32xf32>
    %100 = vector.broadcast %7 : vector<1x32xf32> to vector<8x32xf32>
    %101 = arith.addf %99, %100 : vector<8x32xf32>
    %cst_25 = arith.constant dense<0.000000e+00> : vector<8xf32>
    %102 = vector.multi_reduction <add>, %101, %cst_25 [1] : vector<8x32xf32> to vector<8xf32>
    %103 = vector.shape_cast %102 : vector<8xf32> to vector<8x1xf32>
    %cst_26 = arith.constant 3.200000e+01 : f32
    %104 = vector.broadcast %cst_26 : f32 to vector<8x1xf32>
    %105 = arith.divf %103, %104 : vector<8x1xf32>
    %106 = vector.broadcast %105 : vector<8x1xf32> to vector<8x32xf32>
    %107 = arith.subf %101, %106 : vector<8x32xf32>
    %108 = vector.broadcast %105 : vector<8x1xf32> to vector<8x32xf32>
    %109 = arith.subf %101, %108 : vector<8x32xf32>
    %110 = arith.mulf %107, %109 : vector<8x32xf32>
    %cst_27 = arith.constant dense<0.000000e+00> : vector<8xf32>
    %111 = vector.multi_reduction <add>, %110, %cst_27 [1] : vector<8x32xf32> to vector<8xf32>
    %112 = vector.shape_cast %111 : vector<8xf32> to vector<8x1xf32>
    %cst_28 = arith.constant 3.200000e+01 : f32
    %113 = vector.broadcast %cst_28 : f32 to vector<8x1xf32>
    %114 = arith.divf %112, %113 : vector<8x1xf32>
    %115 = vector.broadcast %105 : vector<8x1xf32> to vector<8x32xf32>
    %116 = arith.subf %101, %115 : vector<8x32xf32>
    %cst_29 = arith.constant 9.99999974E-6 : f32
    %117 = vector.broadcast %cst_29 : f32 to vector<8x1xf32>
    %118 = arith.addf %114, %117 : vector<8x1xf32>
    %119 = math.rsqrt %118 : vector<8x1xf32>
    %120 = vector.broadcast %119 : vector<8x1xf32> to vector<8x32xf32>
    %121 = arith.mulf %116, %120 : vector<8x32xf32>
    %122 = vector.broadcast %8 : vector<1x32xf32> to vector<8x32xf32>
    %123 = arith.mulf %121, %122 : vector<8x32xf32>
    %124 = vector.broadcast %9 : vector<1x32xf32> to vector<8x32xf32>
    %125 = arith.addf %123, %124 : vector<8x32xf32>
    %cst_30 = arith.constant 0.000000e+00 : f32
    %126 = vector.broadcast %cst_30 : f32 to vector<8x32xf32>
    %127 = arith.maximumf %125, %126 : vector<8x32xf32>
    %128 = vector.broadcast %10 : vector<1x32xf32> to vector<8x32xf32>
    %129 = arith.mulf %127, %128 : vector<8x32xf32>
    %cst_31 = arith.constant dense<0.000000e+00> : vector<8xf32>
    %130 = vector.multi_reduction <add>, %129, %cst_31 [1] : vector<8x32xf32> to vector<8xf32>
    %131 = vector.shape_cast %130 : vector<8xf32> to vector<8x1xf32>
    %132 = vector.broadcast %11 : vector<1x1xf32> to vector<8x1xf32>
    %133 = arith.addf %131, %132 : vector<8x1xf32>
    %c0_32 = arith.constant 0 : index
    %c0_33 = arith.constant 0 : index
    %134 = vector.load %arg7[%c0_32, %c0_33] : memref<8x1xf32, #tpu.memory_space<vmem>>, vector<8x1xf32>
    tpu.vector_store %arg7[%c0_32, %c0_33], %133 {strides = array<i32>} : memref<8x1xf32, #tpu.memory_space<vmem>>, vector<8x1xf32>,
    return
  }
  func.func @transform_0(%arg0: i32) -> (i32, i32) {
    %c0_i32 = arith.constant 0 : i32
    %c0_i32_0 = arith.constant 0 : i32
    return %arg0, %c0_i32 : i32, i32
  }
  func.func @transform_1(%arg0: i32) -> (i32, i32) {
    %c0_i32 = arith.constant 0 : i32
    %c0_i32_0 = arith.constant 0 : i32
    return %arg0, %c0_i32 : i32, i32
  }
  func.func @transform_2(%arg0: i32) -> (i32, i32) {
    %c0_i32 = arith.constant 0 : i32
    %c0_i32_0 = arith.constant 0 : i32
    %c0_i32_1 = arith.constant 0 : i32
    return %c0_i32, %c0_i32_0 : i32, i32
  }
  func.func @transform_3(%arg0: i32) -> (i32, i32) {
    %c0_i32 = arith.constant 0 : i32
    %c0_i32_0 = arith.constant 0 : i32
    %c0_i32_1 = arith.constant 0 : i32
    return %c0_i32, %c0_i32_0 : i32, i32
  }
  func.func @transform_4(%arg0: i32) -> (i32, i32) {
    %c0_i32 = arith.constant 0 : i32
    %c0_i32_0 = arith.constant 0 : i32
    %c0_i32_1 = arith.constant 0 : i32
    return %c0_i32, %c0_i32_0 : i32, i32
  }
  func.func @transform_5(%arg0: i32) -> (i32, i32) {
    %c0_i32 = arith.constant 0 : i32
    %c0_i32_0 = arith.constant 0 : i32
    %c0_i32_1 = arith.constant 0 : i32
    return %c0_i32, %c0_i32_0 : i32, i32
  }
  func.func @transform_6(%arg0: i32) -> (i32, i32) {
    %c0_i32 = arith.constant 0 : i32
    %c0_i32_0 = arith.constant 0 : i32
    return %arg0, %c0_i32 : i32, i32
  }
}

</mosaic_0001>

<llo_original>
// kernel: tpu_custom_call.1
$region0: #{tpu_custom_call.1}
  #allocation0 [shape = 'u32[]', space=smem, size = 0x4, offset = 0x4, fixed_abs, tag = 'smem constant byte address 0x4 - core index']
  #allocation1 [shape = 'u32[144,128]{1,0:T(1,128)}', space=vmem, size = 0x12000, scoped, tag = 'internal scratch']
  %s0 = inlined_call_operand.hbm [shape: f32[8,16], index: 0, kind: input, shape index: {}]
  %s1 = inlined_call_operand.vmem [shape: f32[8,4], index: 1, kind: input, shape index: {}]
  %s2 = inlined_call_operand.vmem [shape: f32[16,32], index: 2, kind: input, shape index: {}]
  %s3 = inlined_call_operand.hbm [shape: f32[32,32], index: 3, kind: input, shape index: {}]
  %s4 = inlined_call_operand.hbm [shape: f32[32,32], index: 4, kind: input, shape index: {}]
  %s5 = inlined_call_operand.hbm [shape: f32[15,32], index: 5, kind: input, shape index: {}]
  %s6 = inlined_call_operand.vmem [shape: f32[8,1], index: 6, kind: output, shape index: {}]
  %s7 = sld [smem:[#allocation0]]
  $region50: #{tpu_custom_call.1} parent=0
    _
  %s9 = ssub.s32 1, %s7
  %s10 = scalar_select 0, %s9, %s7
  $region1: #{tpu_custom_call.1} parent=0
    #allocation2 [shape = 'u8[4096]{0}', space=vmem, size = 0x1000, scoped, tag = 'input window, operand 0, single buffered']
    #allocation3 [shape = 's32[1]{0}', space=sflag, size = 0x4, scoped, tag = 'scoped memory for tpu_custom_call.1']
    #allocation4 [shape = 'u8[16384]{0}', space=vmem, size = 0x4000, scoped, tag = 'input window, operand 3, single buffered']
    #allocation5 [shape = 's32[1]{0}', space=sflag, size = 0x4, scoped, tag = 'scoped memory for tpu_custom_call.1']
    #allocation6 [shape = 'u8[16384]{0}', space=vmem, size = 0x4000, scoped, tag = 'input window, operand 4, single buffered']
    #allocation7 [shape = 'u8[8192]{0}', space=vmem, size = 0x2000, scoped, tag = 'input window, operand 5, single buffered']
    #allocation8 [shape = 's32[1]{0}', space=sflag, size = 0x4, scoped, tag = 'scoped memory for tpu_custom_call.1']
    %11 = vsyncpa [#allocation3], 0
    %12 = vsyncpa [#allocation5], 0
    %13 = vsyncpa [#allocation8], 0
    // Predicated region
    $region2: #{tpu_custom_call.1} parent=1 // pred_check
      _
    $region3: #{tpu_custom_call.1} parent=1 // pred_check_branch
      %15 = sbr.rel (0) target = $region5
    $region4: #{tpu_custom_call.1} parent=1 // pred_region
      %s17 = ssub.s32 128, 128
      %18 = vsyncadd [#allocation3], %s17
      %s20 = sshll.u32 [#allocation2], 4
      %s21 = int_to_ptr.vmem [resolvable:$true] %s20
      %23 = dma.hbm_to_vmem [thread:$0]  %s0, 128, %s21, [#allocation3]
    $region5: #{tpu_custom_call.1} parent=1 // pred_fallthru
      _
    // Predicated region
    $region6: #{tpu_custom_call.1} parent=1 // pred_check
      _
    $region7: #{tpu_custom_call.1} parent=1 // pred_check_branch
      %25 = sbr.rel (0) target = $region9
    $region8: #{tpu_custom_call.1} parent=1 // pred_region
      _
    $region9: #{tpu_custom_call.1} parent=1 // pred_fallthru
      _
    // Predicated region
    $region10: #{tpu_custom_call.1} parent=1 // pred_check
      _
    $region11: #{tpu_custom_call.1} parent=1 // pred_check_branch
      %27 = sbr.rel (0) target = $region13
    $region12: #{tpu_custom_call.1} parent=1 // pred_region
      _
    $region13: #{tpu_custom_call.1} parent=1 // pred_fallthru
      _
    // Predicated region
    $region14: #{tpu_custom_call.1} parent=1 // pred_check
      _
    $region15: #{tpu_custom_call.1} parent=1 // pred_check_branch
      %29 = sbr.rel (0) target = $region17
    $region16: #{tpu_custom_call.1} parent=1 // pred_region
      %s31 = ssub.s32 512, 512
      %32 = vsyncadd [#allocation5], %s31
      %s33 = sshll.u32 [#allocation4], 4
      %s34 = int_to_ptr.vmem [resolvable:$true] %s33
      %39 = dma.hbm_to_vmem [thread:$0]  %s3, 512, %s34, [#allocation5], 128, 128, 8
    $region17: #{tpu_custom_call.1} parent=1 // pred_fallthru
      _
    // Predicated region
    $region18: #{tpu_custom_call.1} parent=1 // pred_check
      _
    $region19: #{tpu_custom_call.1} parent=1 // pred_check_branch
      %41 = sbr.rel (0) target = $region21
    $region20: #{tpu_custom_call.1} parent=1 // pred_region
      %s43 = ssub.s32 512, 512
      %44 = vsyncadd [#allocation5], %s43
      %s45 = sshll.u32 [#allocation6], 4
      %s46 = int_to_ptr.vmem [resolvable:$true] %s45
      %51 = dma.hbm_to_vmem [thread:$0]  %s4, 512, %s46, [#allocation5], 128, 128, 8
    $region21: #{tpu_custom_call.1} parent=1 // pred_fallthru
      _
    // Predicated region
    $region22: #{tpu_custom_call.1} parent=1 // pred_check
      _
    $region23: #{tpu_custom_call.1} parent=1 // pred_check_branch
      %53 = sbr.rel (0) target = $region25
    $region24: #{tpu_custom_call.1} parent=1 // pred_region
      %s55 = ssub.s32 256, 256
      %56 = vsyncadd [#allocation8], %s55
      %s57 = sshll.u32 [#allocation7], 4
      %s58 = int_to_ptr.vmem [resolvable:$true] %s57
      %63 = dma.hbm_to_vmem [thread:$0]  %s5, 256, %s58, [#allocation8], 128, 128, 8
    $region25: #{tpu_custom_call.1} parent=1 // pred_fallthru
      _
    // Predicated region
    $region26: #{tpu_custom_call.1} parent=1 // pred_check
      _
    $region27: #{tpu_custom_call.1} parent=1 // pred_check_branch
      %65 = sbr.rel (0) target = $region29
    $region28: #{tpu_custom_call.1} parent=1 // pred_region
      %66 = dma.done [#allocation3], 128
    $region29: #{tpu_custom_call.1} parent=1 // pred_fallthru
      _
    // Predicated region
    $region30: #{tpu_custom_call.1} parent=1 // pred_check
      _
    $region31: #{tpu_custom_call.1} parent=1 // pred_check_branch
      %68 = sbr.rel (0) target = $region33
    $region32: #{tpu_custom_call.1} parent=1 // pred_region
      %69 = dma.done [#allocation5], 512
    $region33: #{tpu_custom_call.1} parent=1 // pred_fallthru
      _
    // Predicated region
    $region34: #{tpu_custom_call.1} parent=1 // pred_check
      _
    $region35: #{tpu_custom_call.1} parent=1 // pred_check_branch
      %71 = sbr.rel (0) target = $region37
    $region36: #{tpu_custom_call.1} parent=1 // pred_region
      %72 = dma.done [#allocation5], 512
    $region37: #{tpu_custom_call.1} parent=1 // pred_fallthru
      _
    // Predicated region
    $region38: #{tpu_custom_call.1} parent=1 // pred_check
      _
    $region39: #{tpu_custom_call.1} parent=1 // pred_check_branch
      %74 = sbr.rel (0) target = $region41
    $region40: #{tpu_custom_call.1} parent=1 // pred_region
      %75 = dma.done [#allocation8], 256
    $region41: #{tpu_custom_call.1} parent=1 // pred_fallthru
      _
    %v76 = vld [vmem:[#allocation7] sm:$0xff]
    %v77 = vld [vmem:[#allocation7 + $0x8] sm:$0x7f]
    %v78 = vld [vmem:[#allocation2] sm:$0xff]
    %v79 = vld [vmem:[%s1] sm:$0xff]
    %v80 = vld [vmem:[%s2] sm:$0xff]
    %v81 = vld [vmem:[%s2 + $0x8] sm:$0xff]
    %v82 = vlaneseq
    %v83 = vshrl.u32 %v82, 7
    %v84 = vsub.s32 0, %v83
    %v85 = vrot.slane %v76, %v84
    %vm86 = vcmask 130048
    %v88 = vsel %vm86, %v78, 0
    %90 = vmatprep.subr.mxu0 0.0
    %91 = vmatpush1.msra.mxu0 %v80
    %92 = vmatprep.subr.mxu0 0.0
    %93 = vmatpush1.msra.mxu0 %v81
    %94 = vmatprep.subr.mxu0 0.0
    %95 = vmatpush1.msra.mxu0 0.0
    %96 = vmatprep.subr.mxu0 0.0
    %97 = vmatpush1.msra.mxu0 0.0
    %98 = vmatprep.subr.mxu0 0.0
    %99 = vmatpush1.msra.mxu0 0.0
    %100 = vmatprep.subr.mxu0 0.0
    %101 = vmatpush1.msra.mxu0 0.0
    %102 = vmatprep.subr.mxu0 0.0
    %103 = vmatpush1.msra.mxu0 0.0
    %104 = vmatprep.subr.mxu0 0.0
    %105 = vmatpush1.msra.mxu0 0.0
    %106 = vmatprep.subr.mxu0 0.0
    %107 = vmatpush1.msra.mxu0 0.0
    %108 = vmatprep.subr.mxu0 0.0
    %109 = vmatpush1.msra.mxu0 0.0
    %110 = vmatprep.subr.mxu0 0.0
    %111 = vmatpush1.msra.mxu0 0.0
    %112 = vmatprep.subr.mxu0 0.0
    %113 = vmatpush1.msra.mxu0 0.0
    %114 = vmatprep.subr.mxu0 0.0
    %115 = vmatpush1.msra.mxu0 0.0
    %116 = vmatprep.subr.mxu0 0.0
    %117 = vmatpush1.msra.mxu0 0.0
    %118 = vmatprep.subr.mxu0 0.0
    %119 = vmatpush1.msra.mxu0 0.0
    %120 = vmatprep.subr.mxu0 0.0
    %121 = vmatpush1.msra.mxu0 0.0
    %122 = vmatprep.subr.mxu0 0.0
    %123 = vmatpush1.msra.mxu0 0.0
    %124 = vmatprep.subr.mxu0 0.0
    %125 = vmatpush1.msra.mxu0 0.0
    %126 = vmatprep.subr.mxu0 0.0
    %127 = vmatpush1.msra.mxu0 0.0
    %128 = vmatprep.subr.mxu0 0.0
    %129 = vmatpush1.msra.mxu0 0.0
    %130 = vmatprep.subr.mxu0 0.0
    %131 = vmatpush1.msra.mxu0 0.0
    %132 = vmatprep.subr.mxu0 0.0
    %133 = vmatpush1.msra.mxu0 0.0
    %134 = vmatprep.subr.mxu0 0.0
    %135 = vmatpush1.msra.mxu0 0.0
    %136 = vmatprep.subr.mxu0 0.0
    %137 = vmatpush1.msra.mxu0 0.0
    %138 = vmatprep.subr.mxu0 0.0
    %139 = vmatpush1.msra.mxu0 0.0
    %140 = vmatprep.subr.mxu0 0.0
    %141 = vmatpush1.msra.mxu0 0.0
    %142 = vmatprep.subr.mxu0 0.0
    %143 = vmatpush1.msra.mxu0 0.0
    %144 = vmatprep.subr.mxu0 0.0
    %145 = vmatpush1.msra.mxu0 0.0
    %146 = vmatprep.subr.mxu0 0.0
    %147 = vmatpush1.msra.mxu0 0.0
    %148 = vmatprep.subr.mxu0 0.0
    %149 = vmatpush1.msra.mxu0 0.0
    %150 = vmatprep.subr.mxu0 0.0
    %151 = vmatpush1.msra.mxu0 0.0
    %152 = vmatprep.subr.mxu0 0.0
    %153 = vmatpush1.msra.mxu0 0.0
    %154 = vmatprep.mubr.f32.mxu0 0.0
    %155 = vmatmul.mubr.f32.gmra.mrb[0].mxu0 %v88
    %v156 = vpop.f32.mrb[0].mxu0
    %v157 = vadd.f32 %v85, %v156
    %v158 = vpop.f32.mrb[0].mxu0
    %159 = vdwg.mxu0
    %vm160 = vcmask 261120
    %v161 = vsel %vm160, %v157, 0.0
    %162 = vadd.xlane.f32.xlu0 %v161
    %v163 = vpop.xlane.xlu0 %162
    %v164 = vrcp.pop 32.0
    %v165 = vmul.f32 %v163, %v164
    %v166 = vsub.f32 %v157, %v165
    %v167 = vmul.f32 %v166, %v166
    %v168 = vsel %vm160, %v167, 0.0
    %169 = vadd.xlane.f32.xlu0 %v168
    %v170 = vpop.xlane.xlu0 %169
    %v171 = vmul.f32 %v170, %v164
    %v172 = vadd.f32 %v171, 1e-05
    %v173 = vrsqrt.pop %v172
    %v174 = vmul.f32 %v166, %v173
    %v175 = vlaneseq
    %v176 = vshrl.u32 %v175, 7
    %v177 = vsub.s32 1, %v176
    %v178 = vrot.slane %v76, %v177
    %v179 = vmul.f32 %v174, %v178
    %v180 = vlaneseq
    %v181 = vshrl.u32 %v180, 7
    %v182 = vsub.s32 2, %v181
    %v183 = vrot.slane %v76, %v182
    %v184 = vadd.f32 %v179, %v183
    %v185 = vmax.f32 %v184, 0.0
    %v186 = vld [vmem:[#allocation4] sm:$0xff]
    %v187 = vld [vmem:[#allocation4 + $0x8] sm:$0xff]
    %v188 = vld [vmem:[#allocation4 + $0x10] sm:$0xff]
    %v189 = vld [vmem:[#allocation4 + $0x18] sm:$0xff]
    %v190 = vlaneseq
    %v191 = vshrl.u32 %v190, 7
    %v192 = vsub.s32 3, %v191
    %v193 = vrot.slane %v76, %v192
    %v195 = vsel %vm160, %v185, 0
    %197 = vmatprep.subr.mxu0 0.0
    %198 = vmatpush1.msra.mxu0 %v186
    %199 = vmatprep.subr.mxu0 0.0
    %200 = vmatpush1.msra.mxu0 %v187
    %201 = vmatprep.subr.mxu0 0.0
    %202 = vmatpush1.msra.mxu0 %v188
    %203 = vmatprep.subr.mxu0 0.0
    %204 = vmatpush1.msra.mxu0 %v189
    %205 = vmatprep.subr.mxu0 0.0
    %206 = vmatpush1.msra.mxu0 0.0
    %207 = vmatprep.subr.mxu0 0.0
    %208 = vmatpush1.msra.mxu0 0.0
    %209 = vmatprep.subr.mxu0 0.0
    %210 = vmatpush1.msra.mxu0 0.0
    %211 = vmatprep.subr.mxu0 0.0
    %212 = vmatpush1.msra.mxu0 0.0
    %213 = vmatprep.subr.mxu0 0.0
    %214 = vmatpush1.msra.mxu0 0.0
    %215 = vmatprep.subr.mxu0 0.0
    %216 = vmatpush1.msra.mxu0 0.0
    %217 = vmatprep.subr.mxu0 0.0
    %218 = vmatpush1.msra.mxu0 0.0
    %219 = vmatprep.subr.mxu0 0.0
    %220 = vmatpush1.msra.mxu0 0.0
    %221 = vmatprep.subr.mxu0 0.0
    %222 = vmatpush1.msra.mxu0 0.0
    %223 = vmatprep.subr.mxu0 0.0
    %224 = vmatpush1.msra.mxu0 0.0
    %225 = vmatprep.subr.mxu0 0.0
    %226 = vmatpush1.msra.mxu0 0.0
    %227 = vmatprep.subr.mxu0 0.0
    %228 = vmatpush1.msra.mxu0 0.0
    %229 = vmatprep.subr.mxu0 0.0
    %230 = vmatpush1.msra.mxu0 0.0
    %231 = vmatprep.subr.mxu0 0.0
    %232 = vmatpush1.msra.mxu0 0.0
    %233 = vmatprep.subr.mxu0 0.0
    %234 = vmatpush1.msra.mxu0 0.0
    %235 = vmatprep.subr.mxu0 0.0
    %236 = vmatpush1.msra.mxu0 0.0
    %237 = vmatprep.subr.mxu0 0.0
    %238 = vmatpush1.msra.mxu0 0.0
    %239 = vmatprep.subr.mxu0 0.0
    %240 = vmatpush1.msra.mxu0 0.0
    %241 = vmatprep.subr.mxu0 0.0
    %242 = vmatpush1.msra.mxu0 0.0
    %243 = vmatprep.subr.mxu0 0.0
    %244 = vmatpush1.msra.mxu0 0.0
    %245 = vmatprep.subr.mxu0 0.0
    %246 = vmatpush1.msra.mxu0 0.0
    %247 = vmatprep.subr.mxu0 0.0
    %248 = vmatpush1.msra.mxu0 0.0
    %249 = vmatprep.subr.mxu0 0.0
    %250 = vmatpush1.msra.mxu0 0.0
    %251 = vmatprep.subr.mxu0 0.0
    %252 = vmatpush1.msra.mxu0 0.0
    %253 = vmatprep.subr.mxu0 0.0
    %254 = vmatpush1.msra.mxu0 0.0
    %255 = vmatprep.subr.mxu0 0.0
    %256 = vmatpush1.msra.mxu0 0.0
    %257 = vmatprep.subr.mxu0 0.0
    %258 = vmatpush1.msra.mxu0 0.0
    %259 = vmatprep.subr.mxu0 0.0
    %260 = vmatpush1.msra.mxu0 0.0
    %261 = vmatprep.mubr.f32.mxu0 0.0
    %262 = vmatmul.mubr.f32.gmra.mrb[0].mxu0 %v195
    %v263 = vpop.f32.mrb[0].mxu0
    %v264 = vadd.f32 %v193, %v263
    %v265 = vpop.f32.mrb[0].mxu0
    %266 = vdwg.mxu0
    %268 = vset.pattern.permute.xlu0 0
    %269 = vperm.xlu0 %268, %v79
    %v270 = vpop.permute.xlu0 %269
    %v272 = vlaneseq
    %v273 = vshrl.u32 %v272, 7
    %v274 = vsub.s32 3, %v273
    %v275 = vrot.slane %v77, %v274
    %v276 = vmul.f32 %v270, %v275
    %v277 = vadd.f32 %v264, %v276
    %278 = vset.pattern.permute.xlu0 1
    %279 = vperm.xlu0 %278, %v79
    %v280 = vpop.permute.xlu0 %279
    %v282 = vlaneseq
    %v283 = vshrl.u32 %v282, 7
    %v284 = vsub.s32 4, %v283
    %v285 = vrot.slane %v77, %v284
    %v286 = vmul.f32 %v280, %v285
    %v287 = vadd.f32 %v277, %v286
    %288 = vset.pattern.permute.xlu0 2
    %289 = vperm.xlu0 %288, %v79
    %v290 = vpop.permute.xlu0 %289
    %v292 = vlaneseq
    %v293 = vshrl.u32 %v292, 7
    %v294 = vsub.s32 5, %v293
    %v295 = vrot.slane %v77, %v294
    %v296 = vmul.f32 %v290, %v295
    %v297 = vadd.f32 %v287, %v296
    %298 = vset.pattern.permute.xlu0 3
    %299 = vperm.xlu0 %298, %v79
    %v300 = vpop.permute.xlu0 %299
    %v302 = vlaneseq
    %v303 = vshrl.u32 %v302, 7
    %v304 = vsub.s32 6, %v303
    %v305 = vrot.slane %v77, %v304
    %v306 = vmul.f32 %v300, %v305
    %v307 = vadd.f32 %v297, %v306
    %v308 = vsel %vm160, %v307, 0.0
    %309 = vadd.xlane.f32.xlu0 %v308
    %v310 = vpop.xlane.xlu0 %309
    %v311 = vmul.f32 %v310, %v164
    %v312 = vsub.f32 %v307, %v311
    %v313 = vmul.f32 %v312, %v312
    %v314 = vsel %vm160, %v313, 0.0
    %315 = vadd.xlane.f32.xlu0 %v314
    %v316 = vpop.xlane.xlu0 %315
    %v317 = vmul.f32 %v316, %v164
    %v318 = vadd.f32 %v317, 1e-05
    %v319 = vrsqrt.pop %v318
    %v320 = vmul.f32 %v312, %v319
    %v321 = vlaneseq
    %v322 = vshrl.u32 %v321, 7
    %v323 = vsub.s32 4, %v322
    %v324 = vrot.slane %v76, %v323
    %v325 = vmul.f32 %v320, %v324
    %v326 = vlaneseq
    %v327 = vshrl.u32 %v326, 7
    %v328 = vsub.s32 5, %v327
    %v329 = vrot.slane %v76, %v328
    %v330 = vadd.f32 %v325, %v329
    %v331 = vmax.f32 %v330, 0.0
    %v332 = vld [vmem:[#allocation6] sm:$0xff]
    %v333 = vld [vmem:[#allocation6 + $0x8] sm:$0xff]
    %v334 = vld [vmem:[#allocation6 + $0x10] sm:$0xff]
    %v335 = vld [vmem:[#allocation6 + $0x18] sm:$0xff]
    %v336 = vlaneseq
    %v337 = vshrl.u32 %v336, 7
    %v338 = vsub.s32 6, %v337
    %v339 = vrot.slane %v76, %v338
    %v341 = vsel %vm160, %v331, 0
    %343 = vmatprep.subr.mxu0 0.0
    %344 = vmatpush1.msra.mxu0 %v332
    %345 = vmatprep.subr.mxu0 0.0
    %346 = vmatpush1.msra.mxu0 %v333
    %347 = vmatprep.subr.mxu0 0.0
    %348 = vmatpush1.msra.mxu0 %v334
    %349 = vmatprep.subr.mxu0 0.0
    %350 = vmatpush1.msra.mxu0 %v335
    %351 = vmatprep.subr.mxu0 0.0
    %352 = vmatpush1.msra.mxu0 0.0
    %353 = vmatprep.subr.mxu0 0.0
    %354 = vmatpush1.msra.mxu0 0.0
    %355 = vmatprep.subr.mxu0 0.0
    %356 = vmatpush1.msra.mxu0 0.0
    %357 = vmatprep.subr.mxu0 0.0
    %358 = vmatpush1.msra.mxu0 0.0
    %359 = vmatprep.subr.mxu0 0.0
    %360 = vmatpush1.msra.mxu0 0.0
    %361 = vmatprep.subr.mxu0 0.0
    %362 = vmatpush1.msra.mxu0 0.0
    %363 = vmatprep.subr.mxu0 0.0
    %364 = vmatpush1.msra.mxu0 0.0
    %365 = vmatprep.subr.mxu0 0.0
    %366 = vmatpush1.msra.mxu0 0.0
    %367 = vmatprep.subr.mxu0 0.0
    %368 = vmatpush1.msra.mxu0 0.0
    %369 = vmatprep.subr.mxu0 0.0
    %370 = vmatpush1.msra.mxu0 0.0
    %371 = vmatprep.subr.mxu0 0.0
    %372 = vmatpush1.msra.mxu0 0.0
    %373 = vmatprep.subr.mxu0 0.0
    %374 = vmatpush1.msra.mxu0 0.0
    %375 = vmatprep.subr.mxu0 0.0
    %376 = vmatpush1.msra.mxu0 0.0
    %377 = vmatprep.subr.mxu0 0.0
    %378 = vmatpush1.msra.mxu0 0.0
    %379 = vmatprep.subr.mxu0 0.0
    %380 = vmatpush1.msra.mxu0 0.0
    %381 = vmatprep.subr.mxu0 0.0
    %382 = vmatpush1.msra.mxu0 0.0
    %383 = vmatprep.subr.mxu0 0.0
    %384 = vmatpush1.msra.mxu0 0.0
    %385 = vmatprep.subr.mxu0 0.0
    %386 = vmatpush1.msra.mxu0 0.0
    %387 = vmatprep.subr.mxu0 0.0
    %388 = vmatpush1.msra.mxu0 0.0
    %389 = vmatprep.subr.mxu0 0.0
    %390 = vmatpush1.msra.mxu0 0.0
    %391 = vmatprep.subr.mxu0 0.0
    %392 = vmatpush1.msra.mxu0 0.0
    %393 = vmatprep.subr.mxu0 0.0
    %394 = vmatpush1.msra.mxu0 0.0
    %395 = vmatprep.subr.mxu0 0.0
    %396 = vmatpush1.msra.mxu0 0.0
    %397 = vmatprep.subr.mxu0 0.0
    %398 = vmatpush1.msra.mxu0 0.0
    %399 = vmatprep.subr.mxu0 0.0
    %400 = vmatpush1.msra.mxu0 0.0
    %401 = vmatprep.subr.mxu0 0.0
    %402 = vmatpush1.msra.mxu0 0.0
    %403 = vmatprep.subr.mxu0 0.0
    %404 = vmatpush1.msra.mxu0 0.0
    %405 = vmatprep.subr.mxu0 0.0
    %406 = vmatpush1.msra.mxu0 0.0
    %407 = vmatprep.mubr.f32.mxu0 0.0
    %408 = vmatmul.mubr.f32.gmra.mrb[0].mxu0 %v341
    %v409 = vpop.f32.mrb[0].mxu0
    %v410 = vadd.f32 %v339, %v409
    %v411 = vpop.f32.mrb[0].mxu0
    %412 = vdwg.mxu0
    %v413 = vsel %vm160, %v410, 0.0
    %414 = vadd.xlane.f32.xlu0 %v413
    %v415 = vpop.xlane.xlu0 %414
    %v416 = vmul.f32 %v415, %v164
    %v417 = vsub.f32 %v410, %v416
    %v418 = vmul.f32 %v417, %v417
    %v419 = vsel %vm160, %v418, 0.0
    %420 = vadd.xlane.f32.xlu0 %v419
    %v421 = vpop.xlane.xlu0 %420
    %v422 = vmul.f32 %v421, %v164
    %v423 = vadd.f32 %v422, 1e-05
    %v424 = vrsqrt.pop %v423
    %v425 = vmul.f32 %v417, %v424
    %v426 = vlaneseq
    %v427 = vshrl.u32 %v426, 7
    %v428 = vsub.s32 7, %v427
    %v429 = vrot.slane %v76, %v428
    %v430 = vmul.f32 %v425, %v429
    %v431 = vlaneseq
    %v432 = vshrl.u32 %v431, 7
    %v433 = vsub.s32 0, %v432
    %v434 = vrot.slane %v77, %v433
    %v435 = vadd.f32 %v430, %v434
    %v436 = vmax.f32 %v435, 0.0
    %v437 = vlaneseq
    %v438 = vshrl.u32 %v437, 7
    %v439 = vsub.s32 1, %v438
    %v440 = vrot.slane %v77, %v439
    %v441 = vmul.f32 %v436, %v440
    %v442 = vsel %vm160, %v441, 0.0
    %443 = vadd.xlane.f32.xlu0 %v442
    %v444 = vpop.xlane.xlu0 %443
    %v445 = vlaneseq
    %v446 = vshrl.u32 %v445, 7
    %v447 = vsub.s32 2, %v446
    %v448 = vrot.slane %v77, %v447
    %v449 = vadd.f32 %v444, %v448
    %vm450 = vcmask 7168
    %451 = vst.msk [vmem:[%s6] sm:$0xff] %vm450, %v449
    // Predicated region
    $region42: #{tpu_custom_call.1} parent=1 // pred_check
      _
    $region43: #{tpu_custom_call.1} parent=1 // pred_check_branch
      %453 = sbr.rel (0) target = $region45
    $region44: #{tpu_custom_call.1} parent=1 // pred_region
      _
    $region45: #{tpu_custom_call.1} parent=1 // pred_fallthru
      _
    // Predicated region
    $region46: #{tpu_custom_call.1} parent=1 // pred_check
      _
    $region47: #{tpu_custom_call.1} parent=1 // pred_check_branch
      %455 = sbr.rel (0) target = $region49
    $region48: #{tpu_custom_call.1} parent=1 // pred_region
      _
    $region49: #{tpu_custom_call.1} parent=1 // pred_fallthru
      _
    %456 = vsyncpa [#allocation3], 1
    %457 = vsyncpa [#allocation5], 1
    %458 = vsyncpa [#allocation8], 1

</llo_original>
